<compile_context>
chip_gen: v7x
topology: tpu7x:2x2x1
jax: 0.10.0
libtpu: 0.0.40
codegen_flags: <defaults>
</compile_context>

<pallas_src>
import jax
import jax.numpy as jnp
from jax import lax
from jax.experimental import pallas as pl
from jax.experimental.pallas import tpu as pltpu


def _conv_gemm_swish_kernel(w_ref, p_ref, o_ref):
    # w_ref: (Cout, 9*Cin + 1)  flattened OIHW conv weight with bias as the
    #                           last column.
    # p_ref: (1, 9*Cin + 1, M)  im2col patches for one (batch, row-block);
    #                           last row is all-ones (bias); M = TH*W lanes.
    # o_ref: (1, Cout, M)       swish(conv(x) + b) for that block (lane-dense).
    acc = jnp.dot(w_ref[...], p_ref[0], preferred_element_type=jnp.float32)
    o_ref[0] = (acc * jax.nn.sigmoid(acc)).astype(o_ref.dtype)


def _pick_row_block(H, W, Cin, Cout, block_budget_bytes=4 * 1024 * 1024):
    """Largest row-block TH dividing H such that the blocks are lane-dense
    (TH*W % 128 == 0, or the full image) and the per-step in+out blocks stay
    within a conservative VMEM budget (safe with double-buffering on v7x's
    smaller VMEM as well as v5e/v6e)."""
    k1 = 9 * Cin + 1
    bytes_per_row = (k1 + Cout) * W * 4  # f32, input-patches + output rows
    candidates = [th for th in range(1, H + 1)
                  if H % th == 0 and ((th * W) % 128 == 0 or th == H)]
    fitting = [th for th in candidates if th * bytes_per_row <= block_budget_bytes]
    if fitting:
        return max(fitting)
    return min(candidates)


def _pixel_shuffle_nchw(y_nchw, r=2):
    """PyTorch nn.PixelShuffle semantics on an NCHW tensor."""
    N, C, H, W = y_nchw.shape
    Co = C // (r * r)
    y = y_nchw.reshape(N, Co, r, r, H, W)
    y = jnp.transpose(y, (0, 1, 4, 2, 5, 3))          # (N, Co, H, r, W, r)
    return y.reshape(N, Co, H * r, W * r)


def upsample_block(x_nchw, w_oihw, bias, row_block=None):
    """Full upsampleBlock.forward: swish(PixelShuffle(2)(conv3x3(x))), NCHW in/out."""
    N, Cin, H, W = x_nchw.shape
    Cout = w_oihw.shape[0]
    assert Cout % 4 == 0, "PixelShuffle(2) needs out_channels % 4 == 0"
    dtype = x_nchw.dtype
    K = 9 * Cin
    K1 = K + 1

    # --- wrapper-side im2col (pad fused into the patch build; single HBM pass) ---
    # patches[n, c*9 + ky*3 + kx, h*W + w] = x_pad[n, c, h+ky, w+kx]
    xp = jnp.pad(x_nchw, ((0, 0), (0, 0), (1, 1), (1, 1)))
    taps = jnp.stack(
        [xp[:, :, ky:ky + H, kx:kx + W] for ky in range(3) for kx in range(3)],
        axis=2)                                        # (N, Cin, 9, H, W)
    patches = taps.reshape(N, K, H * W)
    patches = jnp.concatenate(
        [patches, jnp.ones((N, 1, H * W), dtype)], axis=1)          # (N, K1, HW)

    # Flattened weight (matches patches' (c, ky, kx) ordering) + bias column.
    wk = jnp.concatenate(
        [w_oihw.reshape(Cout, K).astype(dtype), bias.reshape(Cout, 1).astype(dtype)],
        axis=1)                                        # (Cout, K1)

    TH = row_block if row_block is not None else _pick_row_block(H, W, Cin, Cout)
    assert H % TH == 0, "row_block must divide H"
    M = TH * W
    n_hb = H // TH

    z = pl.pallas_call(
        _conv_gemm_swish_kernel,
        out_shape=jax.ShapeDtypeStruct((N, Cout, H * W), dtype),
        grid_spec=pltpu.PrefetchScalarGridSpec(
            num_scalar_prefetch=0,
            grid=(N, n_hb),
            in_specs=[
                pl.BlockSpec((Cout, K1), lambda n, hb: (0, 0)),       # weights (resident)
                pl.BlockSpec((1, K1, M), lambda n, hb: (n, 0, hb)),   # im2col patches
            ],
            out_specs=pl.BlockSpec((1, Cout, M), lambda n, hb: (n, 0, hb)),
        ),
        compiler_params=pltpu.CompilerParams(
            dimension_semantics=("parallel", "parallel")),
    )(wk, patches)                                     # (N, Cout, H*W), swish applied

    # PixelShuffle(2): single XLA transpose pass on the (already NCHW-ordered)
    # kernel output; swish already applied in-kernel (commutes with the shuffle).
    # TODO(synk): the 2x2 sub-pixel interleave itself stays in XLA (expressing a
    # strided scatter via BlockSpec is not supported).
    y = z.reshape(N, Cout, H, W)
    return _pixel_shuffle_nchw(y, r=2)


def _reference(x_nchw, w_oihw, bias):
    """Pure-JAX reference (lax conv) for a sanity check."""
    y = lax.conv_general_dilated(
        x_nchw, w_oihw, window_strides=(1, 1), padding=((1, 1), (1, 1)),
        dimension_numbers=("NCHW", "OIHW", "NCHW"))
    y = y + bias[None, :, None, None]
    y = _pixel_shuffle_nchw(y, r=2)
    return y * jax.nn.sigmoid(y)


if __name__ == "__main__":
    # Small shapes consistent with the module: PixelShuffle(2) needs Cout % 4 == 0.
    N, Cin, Cout, H, W = 2, 4, 16, 16, 16

    key = jax.random.PRNGKey(0)
    kx, kw, kb = jax.random.split(key, 3)
    x = jax.random.normal(kx, (N, Cin, H, W), jnp.float32)
    # Deterministic synthetic parameters (PyTorch Conv2d weight shape: OIHW).
    w = jax.random.normal(kw, (Cout, Cin, 3, 3), jnp.float32) * 0.1
    b = jax.random.normal(kb, (Cout,), jnp.float32) * 0.1

    ref = jax.block_until_ready(_reference(x, w, b))

    # Default (auto-picked row block: full image per block here -> grid (N, 1)).
    out = jax.block_until_ready(upsample_block(x, w, b))
    assert out.shape == (N, Cout // 4, 2 * H, 2 * W), out.shape
    assert jnp.allclose(out, ref, atol=2e-5, rtol=2e-5), "mismatch vs reference"

    # Also exercise the spatially-tiled path (TH=8 -> grid (N, 2), M=128 lanes).
    out_tiled = jax.block_until_ready(upsample_block(x, w, b, row_block=8))
    assert jnp.allclose(out_tiled, ref, atol=2e-5, rtol=2e-5), "tiled mismatch"

    print("KERNEL_OK")
</pallas_src>

<mosaic_0001>
module attributes {stable_mosaic.version = 11 : i64} {
  func.func @_conv_gemm_swish_kernel(%arg0: i32, %arg1: i32, %arg2: memref<16x37xf32, #tpu.memory_space<vmem>>, %arg3: memref<1x37x256xf32, #tpu.memory_space<vmem>>, %arg4: memref<1x16x256xf32, #tpu.memory_space<vmem>>) attributes {dimension_semantics = [#tpu.dimension_semantics<parallel>, #tpu.dimension_semantics<parallel>], iteration_bounds = array<i64: 2, 1>, scalar_prefetch = 0 : i64, scratch_operands = 0 : i64, tpu.core_type = #tpu.core_type<tc>, window_params = [{pipeline_mode = #tpu.pipeline_mode<synchronous>, transform_indices = @transform_0, window_bounds = array<i64: 16, 37>}, {transform_indices = @transform_1, window_bounds = array<i64: 1, 37, 256>}, {transform_indices = @transform_2, window_bounds = array<i64: 1, 16, 256>}]} {
    %c0 = arith.constant 0 : index
    %c0_0 = arith.constant 0 : index
    %0 = vector.load %arg2[%c0, %c0_0] : memref<16x37xf32, #tpu.memory_space<vmem>>, vector<16x37xf32>
    %c0_1 = arith.constant 0 : index
    %c0_2 = arith.constant 0 : index
    %c0_3 = arith.constant 0 : index
    %1 = vector.load %arg3[%c0_1, %c0_2, %c0_3] : memref<1x37x256xf32, #tpu.memory_space<vmem>>, vector<1x37x256xf32>
    %2 = vector.shape_cast %1 : vector<1x37x256xf32> to vector<37x256xf32>
    %cst = arith.constant dense<0.000000e+00> : vector<16x256xf32>
    %3 = tpu.matmul %0, %2, %cst {dimension_numbers = #tpu.dot_dimension_numbers<[1], [0], [0], [1], [0, 0, 1, 1], [], []>} : vector<16x37xf32>, vector<37x256xf32>, vector<16x256xf32> -> vector<16x256xf32>
    %4 = arith.negf %3 : vector<16x256xf32>
    %5 = math.exp %4 : vector<16x256xf32>
    %cst_4 = arith.constant 1.000000e+00 : f32
    %6 = vector.broadcast %cst_4 : f32 to vector<16x256xf32>
    %7 = arith.addf %6, %5 : vector<16x256xf32>
    %8 = arith.divf %6, %7 : vector<16x256xf32>
    %9 = arith.mulf %3, %8 : vector<16x256xf32>
    %c0_5 = arith.constant 0 : index
    %c0_6 = arith.constant 0 : index
    %c0_7 = arith.constant 0 : index
    %10 = vector.load %arg4[%c0_5, %c0_6, %c0_7] : memref<1x16x256xf32, #tpu.memory_space<vmem>>, vector<1x16x256xf32>
    %11 = vector.shape_cast %10 : vector<1x16x256xf32> to vector<16x256xf32>
    %12 = vector.shape_cast %9 : vector<16x256xf32> to vector<1x16x256xf32>
    tpu.vector_store %arg4[%c0_5, %c0_6, %c0_7], %12 {strides = array<i32>} : memref<1x16x256xf32, #tpu.memory_space<vmem>>, vector<1x16x256xf32>,
    return
  }
  func.func @transform_0(%arg0: i32, %arg1: i32) -> (i32, i32) {
    %c0_i32 = arith.constant 0 : i32
    %c0_i32_0 = arith.constant 0 : i32
    %c0_i32_1 = arith.constant 0 : i32
    return %c0_i32, %c0_i32_0 : i32, i32
  }
  func.func @transform_1(%arg0: i32, %arg1: i32) -> (i32, i32, i32) {
    %c0_i32 = arith.constant 0 : i32
    %c0_i32_0 = arith.constant 0 : i32
    return %arg0, %c0_i32, %arg1 : i32, i32, i32
  }
  func.func @transform_2(%arg0: i32, %arg1: i32) -> (i32, i32, i32) {
    %c0_i32 = arith.constant 0 : i32
    %c0_i32_0 = arith.constant 0 : i32
    return %arg0, %c0_i32, %arg1 : i32, i32, i32
  }
}

</mosaic_0001>

<llo_original>
// kernel: tpu_custom_call.1
$region0: #{tpu_custom_call.1}
  #allocation0 [shape = 'u32[]', space=smem, size = 0x4, offset = 0x4, fixed_abs, tag = 'smem constant byte address 0x4 - core index']
  #allocation1 [shape = 'u32[144,128]{1,0:T(1,128)}', space=vmem, size = 0x12000, scoped, tag = 'internal scratch']
  %s0 = inlined_call_operand.vmem [shape: f32[16,37], index: 0, kind: input, shape index: {}]
  %s1 = inlined_call_operand.vmem [shape: f32[2,37,256], index: 1, kind: input, shape index: {}]
  %s2 = inlined_call_operand.hbm [shape: f32[2,16,256], index: 2, kind: output, shape index: {}]
  %s3 = sld [smem:[#allocation0]]
  $region41: #{tpu_custom_call.1} parent=0
    _
  %s5 = ssub.s32 1, %s3
  %s6 = scalar_select 0, %s5, %s3
  $region1: #{tpu_custom_call.1} parent=0
    #allocation2 [shape = 'u8[32768]{0}', space=vmem, size = 0x8000, scoped, tag = 'output window, operand 0']
    #allocation3 [shape = 's32[2]{0}', space=sflag, size = 0x8, scoped, tag = 'scoped memory for tpu_custom_call.1']
    %7 = vsyncpa [#allocation3], 0
    %s8 = scalar_lea.sflag [#allocation3], 1
    %9 = vsyncpa %s8, 0
    loop: start=0, step=1, limit=4
    $region2: #{tpu_custom_call.1} parent=1 // loop_pre_header
      _
    $region3: #{tpu_custom_call.1} parent=1 // loop_header
      %s11 = sphi 0, %s15
      %p12 = scmp.ge.s32.totalorder %s11, 4
      %s18 = sphi 0, %s30
      %s19 = sphi 0, %s26
      %s20 = sphi 0, %s18
      %s21 = sphi 0, %s19
      %s22 = sphi 0, %s20
      %s23 = sphi 0, %s21
      %s31 = sphi 0, %s31
      %s33 = sphi 0, %s31
      %s34 = sphi 0, %s33
      %s48 = sphi 0, %s34
      %s56 = sphi 0, %s58
      %s59 = sphi 0, %s56
      %s60 = sphi 0, %s59
      %s76 = sphi 0, %s60
      %s84 = sphi 0, %s86
      %s87 = sphi 0, %s84
      %s88 = sphi 0, %s87
      %s104 = sphi 0, %s88
    $region4: #{tpu_custom_call.1} parent=1 // loop_header_branch
      %14 = sbr.rel (%p12) target = $region8
    $region5: #{tpu_custom_call.1} parent=1 // loop_body
      %s16 = ssub.s32 %s11, 1
      %s17 = ssub.s32 %s11, 2
      %s24 = sadd.s32 1, %s19
      %p25 = scmp.ge.s32.totalorder %s24, 1
      %s26 = scalar_select %p25, 0, %s24
      %s27 = sadd.s32 1, %s18
      %s28 = scalar_select %p25, %s27, %s18
      %p29 = scmp.ge.s32.totalorder %s28, 2
      %s30 = scalar_select %p29, 0, %s28
      %s32 = sadd.s32 %s31, 1
      %p35 = scmp.eq.s32.totalorder %s11, 1
      %p36 = scmp.ne.s32.totalorder %s31, %s33
      %p37 = scmp.eq.s32.totalorder %s11, 0
      %p38 = por %p36, %p37
      %p39 = scmp.ne.s32.totalorder %s31, %s33
      %p40 = scmp.eq.s32.totalorder %s16, 1
      %p41 = por %p39, %p40
      %p42 = scmp.ne.s32.totalorder %s33, %s34
      %p43 = scmp.eq.s32.totalorder %s16, 0
      %p44 = por %p42, %p43
      %p45 = scmp.ne.s32.totalorder %s33, %s34
      %p46 = scmp.eq.s32.totalorder %s17, 1
      %p47 = por %p45, %p46
      %p49 = scmp.ne.s32.totalorder %s34, %s48
      %p50 = scmp.eq.s32.totalorder %s17, 0
      %p51 = por %p49, %p50
      %s52 = ssub.s32 %s18, %s30
      %s53 = ssub.s32 %s19, %s26
      %s54 = sor.u32 %s52, %s53
      %p55 = scmp.eq.s32.totalorder %s54, 0
      %s57 = sadd.s32 %s56, 1
      %s58 = scalar_select %p55, %s56, %s57
      %p61 = pneg %p55
      %p62 = scmp.eq.s32.totalorder %s11, 1
      %p63 = por %p61, %p62
      %p64 = scmp.ne.s32.totalorder %s56, %s59
      %p65 = scmp.eq.s32.totalorder %s11, 0
      %p66 = por %p64, %p65
      %p67 = scmp.ne.s32.totalorder %s56, %s59
      %p68 = scmp.eq.s32.totalorder %s16, 1
      %p69 = por %p67, %p68
      %p70 = scmp.ne.s32.totalorder %s59, %s60
      %p71 = scmp.eq.s32.totalorder %s16, 0
      %p72 = por %p70, %p71
      %p73 = scmp.ne.s32.totalorder %s59, %s60
      %p74 = scmp.eq.s32.totalorder %s17, 1
      %p75 = por %p73, %p74
      %p77 = scmp.ne.s32.totalorder %s60, %s76
      %p78 = scmp.eq.s32.totalorder %s17, 0
      %p79 = por %p77, %p78
      %s80 = ssub.s32 %s18, %s30
      %s81 = ssub.s32 %s19, %s26
      %s82 = sor.u32 %s80, %s81
      %p83 = scmp.eq.s32.totalorder %s82, 0
      %s85 = sadd.s32 %s84, 1
      %s86 = scalar_select %p83, %s84, %s85
      %p89 = pneg %p83
      %p90 = scmp.eq.s32.totalorder %s11, 1
      %p91 = por %p89, %p90
      %p92 = scmp.ne.s32.totalorder %s84, %s87
      %p93 = scmp.eq.s32.totalorder %s11, 0
      %p94 = por %p92, %p93
      %p95 = scmp.ne.s32.totalorder %s84, %s87
      %p96 = scmp.eq.s32.totalorder %s16, 1
      %p97 = por %p95, %p96
      %p98 = scmp.ne.s32.totalorder %s87, %s88
      %p99 = scmp.eq.s32.totalorder %s16, 0
      %p100 = por %p98, %p99
      %p101 = scmp.ne.s32.totalorder %s87, %s88
      %p102 = scmp.eq.s32.totalorder %s17, 1
      %p103 = por %p101, %p102
      %p105 = scmp.ne.s32.totalorder %s88, %s104
      %p106 = scmp.eq.s32.totalorder %s17, 0
      %p107 = por %p105, %p106
      %p108 = scmp.le.s32.totalorder 1, %s11
      %p109 = scmp.lt.s32.totalorder %s11, 3
      %p110 = pnand %p108, %p109
      %p111 = pneg %p110
      // Predicated region
      $region9: #{tpu_custom_call.1} parent=5 // pred_check
        _
      $region10: #{tpu_custom_call.1} parent=5 // pred_check_branch
        %113 = sbr.rel (%p110) target = $region12
      $region11: #{tpu_custom_call.1} parent=5 // pred_region
        %s114 = ssub.s32 %s11, 1
        // Predicated region
        $region13: #{tpu_custom_call.1} parent=11 // pred_check
          %p115 = pneg %p44
        $region14: #{tpu_custom_call.1} parent=11 // pred_check_branch
          %117 = sbr.rel (%p115) target = $region16
        $region15: #{tpu_custom_call.1} parent=11 // pred_region
          _
        $region16: #{tpu_custom_call.1} parent=11 // pred_fallthru
          _
      $region12: #{tpu_custom_call.1} parent=5 // pred_fallthru
        _
      %p118 = scmp.lt.s32.totalorder %s11, 2
      // Predicated region
      $region17: #{tpu_custom_call.1} parent=5 // pred_check
        %p119 = pneg %p118
      $region18: #{tpu_custom_call.1} parent=5 // pred_check_branch
        %121 = sbr.rel (%p119) target = $region20
      $region19: #{tpu_custom_call.1} parent=5 // pred_region
        // Predicated region
        $region21: #{tpu_custom_call.1} parent=19 // pred_check
          %p122 = pneg %p66
        $region22: #{tpu_custom_call.1} parent=19 // pred_check_branch
          %124 = sbr.rel (%p122) target = $region24
        $region23: #{tpu_custom_call.1} parent=19 // pred_region
          %s125 = smul.u32 2, %s19
          %p126 = scmp.lt.s32.totalorder %s18, 1
          %s127 = scalar_select %p126, %s18, 1
          %p128 = scmp.lt.s32.totalorder %s125, 1
          %s129 = scalar_select %p128, %s125, 1
          %s130 = smul.addr %s127, 10
          %s131 = sadd.s32 %s129, %s130
          %s132 = smul.addr %s131, 8
          %s133 = scalar_lea.vmem %s1, %s132
          %s134 = smul.u32 2, %s19
        $region24: #{tpu_custom_call.1} parent=19 // pred_fallthru
          _
      $region20: #{tpu_custom_call.1} parent=5 // pred_fallthru
        _
      %p135 = scmp.le.s32.totalorder 1, %s11
      %p136 = scmp.lt.s32.totalorder %s11, 3
      %p137 = pnand %p135, %p136
      %p138 = pneg %p137
      // Predicated region
      $region25: #{tpu_custom_call.1} parent=5 // pred_check
        _
      $region26: #{tpu_custom_call.1} parent=5 // pred_check_branch
        %140 = sbr.rel (%p137) target = $region28
      $region27: #{tpu_custom_call.1} parent=5 // pred_region
        %s141 = ssub.s32 %s11, 1
        %p142 = pneg %p44
        %p143 = pneg %p41
        %s144 = smul.u32 2, %s21
        %p145 = scmp.lt.s32.totalorder %s20, 1
        %s146 = scalar_select %p145, %s20, 1
        %p147 = scmp.lt.s32.totalorder %s144, 1
        %s148 = scalar_select %p147, %s144, 1
        %s149 = smul.addr %s146, 10
        %s150 = sadd.s32 %s148, %s149
        %s151 = smul.addr %s150, 8
        %s152 = scalar_lea.vmem %s1, %s151
        %p153 = pneg %p72
        %p154 = pneg %p69
        %p155 = pneg %p100
        %p156 = pneg %p97
        %s157 = sand.u32 %s87, 1
        %s158 = scalar_lea.sflag [#allocation3], %s157
        %s159 = sand.u32 %s87, 1
        %s160 = smul.addr %s159, 32
        %s161 = scalar_lea.vmem [#allocation2], %s160
        %s162 = smul.u32 2, %s21
        %p163 = scmp.lt.s32.totalorder %s20, 1
        %s164 = scalar_select %p163, %s20, 1
        %p165 = scmp.lt.s32.totalorder %s162, 1
        %s166 = scalar_select %p165, %s162, 1
        %s167 = smul.addr %s164, 10
        %s168 = sadd.s32 %s166, %s167
        %s169 = smul.addr %s168, 8
        %s170 = scalar_lea.vmem %s1, %s169
        %s171 = smul.u32 2, %s21
        %s172 = smul.u32 2, %s21
        %v173 = vld [vmem:[%s0] sm:$0xff]
        %v174 = vld [vmem:[%s0 + $0x8] sm:$0xff]
        %v175 = vld [vmem:[%s170] sm:$0xff]
        %v176 = vld [vmem:[%s170 + $0x8] sm:$0xff]
        %v177 = vld [vmem:[%s170 + $0x10] sm:$0xff]
        %v178 = vld [vmem:[%s170 + $0x18] sm:$0xff]
        %v179 = vld [vmem:[%s170 + $0x20] sm:$0xff]
        %v180 = vld [vmem:[%s170 + $0x28] sm:$0xff]
        %v181 = vld [vmem:[%s170 + $0x30] sm:$0xff]
        %v182 = vld [vmem:[%s170 + $0x38] sm:$0xff]
        %v183 = vld [vmem:[%s170 + $0x40] sm:$0x1f]
        %v184 = vld [vmem:[%s170 + $0x48] sm:$0x1f]
        %vm185 = vcmask 302080
        %v187 = vsel %vm185, %v173, 0
        %v190 = vsel %vm185, %v174, 0
        %vm192 = vcmask 1044480
        %v194 = vsel %vm192, %v183, 0
        %v197 = vsel %vm192, %v184, 0
        %199 = vmatprep.subr.mxu0 %v176
        %200 = vmatpush1.msra.mxu0 %v175
        %201 = vmatprep.subr.mxu0 %v178
        %202 = vmatpush1.msra.mxu0 %v177
        %203 = vmatprep.subr.mxu0 %v180
        %204 = vmatpush1.msra.mxu0 %v179
        %205 = vmatprep.subr.mxu0 %v182
        %206 = vmatpush1.msra.mxu0 %v181
        %207 = vmatprep.subr.mxu0 %v197
        %208 = vmatpush1.msra.mxu0 %v194
        %209 = vmatprep.subr.mxu0 0.0
        %210 = vmatpush1.msra.mxu0 0.0
        %211 = vmatprep.subr.mxu0 0.0
        %212 = vmatpush1.msra.mxu0 0.0
        %213 = vmatprep.subr.mxu0 0.0
        %214 = vmatpush1.msra.mxu0 0.0
        %215 = vmatprep.subr.mxu0 0.0
        %216 = vmatpush1.msra.mxu0 0.0
        %217 = vmatprep.subr.mxu0 0.0
        %218 = vmatpush1.msra.mxu0 0.0
        %219 = vmatprep.subr.mxu0 0.0
        %220 = vmatpush1.msra.mxu0 0.0
        %221 = vmatprep.subr.mxu0 0.0
        %222 = vmatpush1.msra.mxu0 0.0
        %223 = vmatprep.subr.mxu0 0.0
        %224 = vmatpush1.msra.mxu0 0.0
        %225 = vmatprep.subr.mxu0 0.0
        %226 = vmatpush1.msra.mxu0 0.0
        %227 = vmatprep.subr.mxu0 0.0
        %228 = vmatpush1.msra.mxu0 0.0
        %229 = vmatprep.subr.mxu0 0.0
        %230 = vmatpush1.msra.mxu0 0.0
        %231 = vmatprep.subr.mxu0 0.0
        %232 = vmatpush1.msra.mxu0 0.0
        %233 = vmatprep.subr.mxu0 0.0
        %234 = vmatpush1.msra.mxu0 0.0
        %235 = vmatprep.subr.mxu0 0.0
        %236 = vmatpush1.msra.mxu0 0.0
        %237 = vmatprep.subr.mxu0 0.0
        %238 = vmatpush1.msra.mxu0 0.0
        %239 = vmatprep.subr.mxu0 0.0
        %240 = vmatpush1.msra.mxu0 0.0
        %241 = vmatprep.subr.mxu0 0.0
        %242 = vmatpush1.msra.mxu0 0.0
        %243 = vmatprep.subr.mxu0 0.0
        %244 = vmatpush1.msra.mxu0 0.0
        %245 = vmatprep.subr.mxu0 0.0
        %246 = vmatpush1.msra.mxu0 0.0
        %247 = vmatprep.subr.mxu0 0.0
        %248 = vmatpush1.msra.mxu0 0.0
        %249 = vmatprep.subr.mxu0 0.0
        %250 = vmatpush1.msra.mxu0 0.0
        %251 = vmatprep.subr.mxu0 0.0
        %252 = vmatpush1.msra.mxu0 0.0
        %253 = vmatprep.subr.mxu0 0.0
        %254 = vmatpush1.msra.mxu0 0.0
        %255 = vmatprep.subr.mxu0 0.0
        %256 = vmatpush1.msra.mxu0 0.0
        %257 = vmatprep.subr.mxu0 0.0
        %258 = vmatpush1.msra.mxu0 0.0
        %259 = vmatprep.subr.mxu0 0.0
        %260 = vmatpush1.msra.mxu0 0.0
        %261 = vmatprep.subr.mxu0 0.0
        %262 = vmatpush1.msra.mxu0 0.0
        %263 = vmatprep.mubr.f32.mxu0 0.0
        %264 = vmatmul.mubr.f32.gmra.mrb[0].mxu0 %v187
        %v265 = vpop.f32.mrb[0].mxu0
        %v266 = vadd.f32 0.0, %v265
        %v267 = vpop.f32.mrb[0].mxu0
        %v268 = vadd.f32 0.0, %v267
        %269 = vmatprep.mubr.f32.mxu0 0.0
        %270 = vmatmul.mubr.f32.gmra.mrb[0].mxu0 %v190
        %v271 = vpop.f32.mrb[0].mxu0
        %v272 = vadd.f32 0.0, %v271
        %v273 = vpop.f32.mrb[0].mxu0
        %v274 = vadd.f32 0.0, %v273
        %275 = vdwg.mxu0
        %v276 = vxor.u32 %v266, 2147483648
        %v277 = vxor.u32 %v268, 2147483648
        %v278 = vxor.u32 %v272, 2147483648
        %v279 = vxor.u32 %v274, 2147483648
        %v280 = vmul.f32 %v276, 1.442695
        %v281 = vpow.pop %v280
        %v282 = vmul.f32 %v277, 1.442695
        %v283 = vpow.pop %v282
        %v284 = vmul.f32 %v278, 1.442695
        %v285 = vpow.pop %v284
        %v286 = vmul.f32 %v279, 1.442695
        %v287 = vpow.pop %v286
        %v288 = vadd.f32 %v281, 1.0
        %v289 = vadd.f32 %v283, 1.0
        %v290 = vadd.f32 %v285, 1.0
        %v291 = vadd.f32 %v287, 1.0
        %v292 = vrcp.pop %v288
        %v293 = vmul.f32 1.0, %v292
        %v294 = vrcp.pop %v289
        %v295 = vmul.f32 1.0, %v294
        %v296 = vrcp.pop %v290
        %v297 = vmul.f32 1.0, %v296
        %v298 = vrcp.pop %v291
        %v299 = vmul.f32 1.0, %v298
        %v300 = vmul.f32 %v266, %v293
        %v301 = vmul.f32 %v268, %v295
        %v302 = vmul.f32 %v272, %v297
        %v303 = vmul.f32 %v274, %v299
        %304 = vst [vmem:[%s161] sm:$0xff] %v300
        %305 = vst [vmem:[%s161 + $0x8] sm:$0xff] %v301
        %306 = vst [vmem:[%s161 + $0x10] sm:$0xff] %v302
        %307 = vst [vmem:[%s161 + $0x18] sm:$0xff] %v303
        %s308 = sand.u32 %s87, 1
        %s309 = scalar_lea.sflag [#allocation3], %s308
        %s310 = sand.u32 %s87, 1
        %s311 = smul.addr %s310, 32
        %s312 = scalar_lea.vmem [#allocation2], %s311
        // Predicated region
        $region29: #{tpu_custom_call.1} parent=27 // pred_check
          %p313 = pneg %p97
        $region30: #{tpu_custom_call.1} parent=27 // pred_check_branch
          %315 = sbr.rel (%p313) target = $region32
        $region31: #{tpu_custom_call.1} parent=27 // pred_region
          %s316 = smul.u32 2, %s21
          %s318 = ssub.s32 512, 512
          %319 = vsyncadd %s309, %s318
          %s320 = smul.addr %s20, 4
          %s321 = sadd.s32 %s316, %s320
          %s322 = smul.addr %s321, 128
          %s323 = scalar_lea.hbm %s2, %s322
          %s324 = sshll.u32 %s312, 4
          %s325 = int_to_ptr.vmem [resolvable:$true] %s324
          %330 = dma.vmem_to_hbm [thread:$0]  %s325, 512, %s323, %s309, 256, 256, 16
        $region32: #{tpu_custom_call.1} parent=27 // pred_fallthru
          _
      $region28: #{tpu_custom_call.1} parent=5 // pred_fallthru
        _
      %p331 = scmp.le.s32.totalorder 2, %s11
      // Predicated region
      $region33: #{tpu_custom_call.1} parent=5 // pred_check
        %p332 = pneg %p331
      $region34: #{tpu_custom_call.1} parent=5 // pred_check_branch
        %334 = sbr.rel (%p332) target = $region36
      $region35: #{tpu_custom_call.1} parent=5 // pred_region
        %s335 = ssub.s32 %s11, 2
        // Predicated region
        $region37: #{tpu_custom_call.1} parent=35 // pred_check
          %p336 = pneg %p103
        $region38: #{tpu_custom_call.1} parent=35 // pred_check_branch
          %338 = sbr.rel (%p336) target = $region40
        $region39: #{tpu_custom_call.1} parent=35 // pred_region
          %s339 = sand.u32 %s88, 1
          %s340 = scalar_lea.sflag [#allocation3], %s339
          %s341 = sand.u32 %s88, 1
          %s342 = smul.addr %s341, 32
          %s343 = scalar_lea.vmem [#allocation2], %s342
          %344 = dma.done %s340, 512
        $region40: #{tpu_custom_call.1} parent=35 // pred_fallthru
          _
      $region36: #{tpu_custom_call.1} parent=5 // pred_fallthru
        _
    $region6: #{tpu_custom_call.1} parent=1 // loop_footer
      %s15 = sadd.s32 1, %s11
    $region7: #{tpu_custom_call.1} parent=1 // loop_footer_branch
      %10 = sbr.rel target = $region3
    $region8: #{tpu_custom_call.1} parent=1 // loop_exit
      _
    %345 = vsyncpa [#allocation3], 1
    %s346 = scalar_lea.sflag [#allocation3], 1
    %347 = vsyncpa %s346, 1

</llo_original>
